<compile_context>
chip_gen: v5e
topology: v5e:2x2
jax: 0.10.0
libtpu: 0.0.40
codegen_flags: <defaults>
</compile_context>

<pallas_src>
import functools
import numpy as np
import jax
import jax.numpy as jnp
from jax.experimental import pallas as pl
from jax.experimental.pallas import tpu as pltpu


# ----------------------------------------------------------------------------
# Kernels: y = x * scale + shift, scale/shift broadcast per row (= per (b, c)).
# ----------------------------------------------------------------------------
def _fbn_kernel_blocked(x_ref, scale_ref, shift_ref, o_ref):
    # x_ref: (TB, TC) native dtype ; scale/shift: (TB, 1) f32 (lane broadcast)
    x = x_ref[...].astype(jnp.float32)
    o_ref[...] = (x * scale_ref[...] + shift_ref[...]).astype(o_ref.dtype)


def _fbn_kernel_resident(x_ref, scale_ref, shift_ref, o_ref, *, tb):
    # scale/shift are the full (padded) per-row vectors, DMA'd once and sliced.
    r0 = pl.multiple_of(pl.program_id(0) * tb, 8)
    s = scale_ref[pl.ds(r0, tb), :]
    t = shift_ref[pl.ds(r0, tb), :]
    x = x_ref[...].astype(jnp.float32)
    o_ref[...] = (x * s + t).astype(o_ref.dtype)


# ----------------------------------------------------------------------------
# Tiling helpers.
# ----------------------------------------------------------------------------
def _row_multiple(itemsize):
    # sublane packing: f32 -> 8 rows/vreg, bf16 -> 16, 8-bit -> 32
    return 8 * max(1, 4 // int(itemsize))


def _chip_params():
    """(target bytes per input block, scoped VMEM limit) per TPU generation."""
    target, vmem_limit = 4 << 20, 32 << 20            # safe default
    try:
        phys = int(pltpu.get_tpu_info().vmem_capacity_bytes)
        if phys >= (128 << 20):                       # v5e / v6e: 128 MiB VMEM
            target, vmem_limit = 6 << 20, 64 << 20
        else:                                         # v7x-class: 64 MiB VMEM
            target, vmem_limit = 5 << 20, 32 << 20
    except Exception:
        pass
    return target, vmem_limit


def _choose_tiles(n_rows, n_cols, itemsize, target_bytes):
    """Pick (row_tile, col_tile) for a lane-dense (n_rows, n_cols) stream."""
    row_mult = _row_multiple(itemsize)

    # Column tiling only when even a minimum-height row block would blow VMEM.
    col_tile = n_cols
    if row_mult * n_cols * itemsize > target_bytes and n_cols > 128:
        col_tile = max(128, (target_bytes // (row_mult * itemsize)) // 128 * 128)
        col_tile = min(col_tile, n_cols)

    rows_fit = max(1, target_bytes // (col_tile * itemsize))
    if rows_fit >= n_rows or n_rows <= row_mult:
        tb = n_rows
    else:
        tb = max(row_mult, (rows_fit // row_mult) * row_mult)

    # v7x megacore: guarantee >= 2 grid steps when the problem allows it
    # (one extra ~0.35us step is noise on single-TC v5e/v6e).
    if pl.cdiv(n_rows, tb) * pl.cdiv(n_cols, col_tile) == 1:
        half_rows = ((n_rows + 1) // 2 + row_mult - 1) // row_mult * row_mult
        if half_rows < n_rows:
            tb = half_rows
        elif n_cols >= 256:
            ct = max(128, ((n_cols // 2) // 128) * 128)
            if ct < n_cols:
                col_tile = ct
    return tb, col_tile


# ----------------------------------------------------------------------------
# Wrapper.
# ----------------------------------------------------------------------------
def frozen_batch_norm_2d(x, weight, bias, running_mean, running_var, eps=1e-5):
    """x: (B, C, H, W) any float dtype; weight/bias/running_mean/running_var: (C,)."""
    B, C, H, W = x.shape
    out_dtype = x.dtype
    itemsize = jnp.dtype(x.dtype).itemsize

    # O(C) folded affine, computed once in f32 (negligible next to the x pass).
    scale = weight.astype(jnp.float32) * jax.lax.rsqrt(
        running_var.astype(jnp.float32) + jnp.float32(eps))
    shift = bias.astype(jnp.float32) - running_mean.astype(jnp.float32) * scale

    BC, HW = B * C, H * W
    x2 = x.reshape(BC, HW)                         # lane-dense view, native dtype
    scale_rows = jnp.tile(scale, B).reshape(BC, 1)  # row r = b*C + c -> scale[c]
    shift_rows = jnp.tile(shift, B).reshape(BC, 1)

    target_bytes, vmem_limit = _chip_params()
    TB, TC = _choose_tiles(BC, HW, itemsize, target_bytes)
    n_row_blk = pl.cdiv(BC, TB)
    n_col_blk = pl.cdiv(HW, TC)
    grid = (n_row_blk, n_col_blk)

    # Keep scale/shift resident in VMEM (single DMA across the whole grid) when
    # small; otherwise stream a (TB, 1) sliver alongside each x block.
    padded_rows = n_row_blk * TB
    resident = padded_rows <= 1024
    if resident:
        if padded_rows != BC:
            pad = padded_rows - BC
            scale_rows = jnp.pad(scale_rows, ((0, pad), (0, 0)))
            shift_rows = jnp.pad(shift_rows, ((0, pad), (0, 0)))
        kernel = functools.partial(_fbn_kernel_resident, tb=TB)
        aff_spec = pl.BlockSpec((padded_rows, 1), lambda i, j: (0, 0))
    else:
        kernel = _fbn_kernel_blocked
        aff_spec = pl.BlockSpec((TB, 1), lambda i, j: (i, 0))

    out = pl.pallas_call(
        kernel,
        out_shape=jax.ShapeDtypeStruct((BC, HW), out_dtype),
        grid_spec=pl.GridSpec(
            grid=grid,
            in_specs=[
                pl.BlockSpec((TB, TC), lambda i, j: (i, j)),   # activations
                aff_spec,                                      # per-row scale
                aff_spec,                                      # per-row shift
            ],
            out_specs=pl.BlockSpec((TB, TC), lambda i, j: (i, j)),
        ),
        compiler_params=pltpu.CompilerParams(
            dimension_semantics=("parallel", "parallel"),
            vmem_limit_bytes=vmem_limit,
        ),
    )(x2, scale_rows, shift_rows)

    return out.reshape(B, C, H, W)


# ----------------------------------------------------------------------------
# Pure-numpy reference (float64), mirroring the PyTorch forward exactly.
# ----------------------------------------------------------------------------
def _frozen_bn_ref(x, w, b, rm, rv, eps=1e-5):
    scale = w / np.sqrt(rv + eps)
    shift = b - rm * scale
    C = w.shape[0]
    return x * scale.reshape(1, C, 1, 1) + shift.reshape(1, C, 1, 1)


if __name__ == "__main__":
    key = jax.random.PRNGKey(0)
    k1, k2, k3, k4, k5 = jax.random.split(key, 5)

    B, C, H, W = 2, 4, 16, 16
    x = jax.random.normal(k1, (B, C, H, W), dtype=jnp.float32)
    weight = jax.random.uniform(k2, (C,), minval=0.5, maxval=1.5, dtype=jnp.float32)
    bias = 0.1 * jax.random.normal(k3, (C,), dtype=jnp.float32)
    running_mean = 0.1 * jax.random.normal(k4, (C,), dtype=jnp.float32)
    running_var = jax.random.uniform(k5, (C,), minval=0.5, maxval=1.5,
                                     dtype=jnp.float32)

    w64 = np.asarray(weight, np.float64)
    b64 = np.asarray(bias, np.float64)
    rm64 = np.asarray(running_mean, np.float64)
    rv64 = np.asarray(running_var, np.float64)

    # f32 path
    y = frozen_batch_norm_2d(x, weight, bias, running_mean, running_var)
    jax.block_until_ready(y)
    assert y.shape == (B, C, H, W) and y.dtype == x.dtype
    y_ref = _frozen_bn_ref(np.asarray(x, np.float64), w64, b64, rm64, rv64)
    np.testing.assert_allclose(np.asarray(y, np.float64), y_ref,
                               rtol=1e-5, atol=1e-5)

    # bf16 path (native-dtype I/O, in-kernel f32 compute)
    xb = x.astype(jnp.bfloat16)
    yb = frozen_batch_norm_2d(xb, weight, bias, running_mean, running_var)
    jax.block_until_ready(yb)
    assert yb.shape == (B, C, H, W) and yb.dtype == jnp.bfloat16
    yb_ref = _frozen_bn_ref(np.asarray(xb, np.float64), w64, b64, rm64, rv64)
    np.testing.assert_allclose(np.asarray(yb, np.float64), yb_ref,
                               rtol=1e-2, atol=1e-2)

    print("KERNEL_OK")
</pallas_src>

<mosaic_0001>
module attributes {stable_mosaic.version = 11 : i64} {
  func.func @_fbn_kernel_resident(%arg0: i32, %arg1: i32, %arg2: memref<8x128xf32, #tpu.memory_space<vmem>>, %arg3: memref<8x1xf32, #tpu.memory_space<vmem>>, %arg4: memref<8x1xf32, #tpu.memory_space<vmem>>, %arg5: memref<8x128xf32, #tpu.memory_space<vmem>>) attributes {dimension_semantics = [#tpu.dimension_semantics<parallel>, #tpu.dimension_semantics<parallel>], iteration_bounds = array<i64: 1, 2>, scalar_prefetch = 0 : i64, scratch_operands = 0 : i64, tpu.core_type = #tpu.core_type<tc>, window_params = [{transform_indices = @transform_0, window_bounds = array<i64: 8, 128>}, {pipeline_mode = #tpu.pipeline_mode<synchronous>, transform_indices = @transform_1, window_bounds = array<i64: 8, 1>}, {pipeline_mode = #tpu.pipeline_mode<synchronous>, transform_indices = @transform_2, window_bounds = array<i64: 8, 1>}, {transform_indices = @transform_3, window_bounds = array<i64: 8, 128>}]} {
    %c8_i32 = arith.constant 8 : i32
    %0 = arith.muli %arg0, %c8_i32 : i32
    %1 = tpu.assume_multiple %0, 8 : i32
    %2 = arith.index_cast %1 : i32 to index
    %c0 = arith.constant 0 : index
    %3 = vector.load %arg3[%2, %c0] : memref<8x1xf32, #tpu.memory_space<vmem>>, vector<8x1xf32>
    %4 = arith.index_cast %1 : i32 to index
    %c0_0 = arith.constant 0 : index
    %5 = vector.load %arg4[%4, %c0_0] : memref<8x1xf32, #tpu.memory_space<vmem>>, vector<8x1xf32>
    %c0_1 = arith.constant 0 : index
    %c0_2 = arith.constant 0 : index
    %6 = vector.load %arg2[%c0_1, %c0_2] : memref<8x128xf32, #tpu.memory_space<vmem>>, vector<8x128xf32>
    %7 = vector.broadcast %3 : vector<8x1xf32> to vector<8x128xf32>
    %8 = arith.mulf %6, %7 : vector<8x128xf32>
    %9 = vector.broadcast %5 : vector<8x1xf32> to vector<8x128xf32>
    %10 = arith.addf %8, %9 : vector<8x128xf32>
    %c0_3 = arith.constant 0 : index
    %c0_4 = arith.constant 0 : index
    %11 = vector.load %arg5[%c0_3, %c0_4] : memref<8x128xf32, #tpu.memory_space<vmem>>, vector<8x128xf32>
    tpu.vector_store %arg5[%c0_3, %c0_4], %10 {strides = array<i32>} : memref<8x128xf32, #tpu.memory_space<vmem>>, vector<8x128xf32>,
    return
  }
  func.func @transform_0(%arg0: i32, %arg1: i32) -> (i32, i32) {
    %c0_i32 = arith.constant 0 : i32
    return %arg0, %arg1 : i32, i32
  }
  func.func @transform_1(%arg0: i32, %arg1: i32) -> (i32, i32) {
    %c0_i32 = arith.constant 0 : i32
    %c0_i32_0 = arith.constant 0 : i32
    %c0_i32_1 = arith.constant 0 : i32
    return %c0_i32, %c0_i32_0 : i32, i32
  }
  func.func @transform_2(%arg0: i32, %arg1: i32) -> (i32, i32) {
    %c0_i32 = arith.constant 0 : i32
    %c0_i32_0 = arith.constant 0 : i32
    %c0_i32_1 = arith.constant 0 : i32
    return %c0_i32, %c0_i32_0 : i32, i32
  }
  func.func @transform_3(%arg0: i32, %arg1: i32) -> (i32, i32) {
    %c0_i32 = arith.constant 0 : i32
    return %arg0, %arg1 : i32, i32
  }
}

</mosaic_0001>

<llo_original>
// kernel: tpu_custom_call.1
$region0: #{tpu_custom_call.1}
  #allocation0 [shape = 'u32[]', space=smem, size = 0x4, offset = 0x4, fixed_abs, tag = 'smem constant byte address 0x4 - core index']
  #allocation1 [shape = 'u32[72,128]{1,0:T(1,128)}', space=vmem, size = 0x9000, scoped, tag = 'internal scratch']
  %s0 = inlined_call_operand.vmem [shape: f32[8,256], index: 0, kind: input, shape index: {}]
  %s1 = inlined_call_operand.vmem [shape: f32[8,1], index: 1, kind: input, shape index: {}]
  %s2 = inlined_call_operand.vmem [shape: f32[8,1], index: 2, kind: input, shape index: {}]
  %s3 = inlined_call_operand.hbm [shape: f32[8,256], index: 3, kind: output, shape index: {}]
  %s4 = sld [smem:[#allocation0]]
  $region45: #{tpu_custom_call.1} parent=0
    _
  %s6 = ssub.s32 1, %s4
  %s7 = scalar_select 0, %s6, %s4
  $region1: #{tpu_custom_call.1} parent=0
    #allocation2 [shape = 'u8[8192]{0}', space=vmem, size = 0x2000, scoped, tag = 'output window, operand 0']
    #allocation3 [shape = 's32[2]{0}', space=sflag, size = 0x8, scoped, tag = 'scoped memory for tpu_custom_call.1']
    %8 = vsyncpa [#allocation3], 0
    %s9 = scalar_lea.sflag [#allocation3], 1
    %10 = vsyncpa %s9, 0
    loop: start=0, step=1, limit=4
    $region2: #{tpu_custom_call.1} parent=1 // loop_pre_header
      _
    $region3: #{tpu_custom_call.1} parent=1 // loop_header
      %s12 = sphi 0, %s16
      %p13 = scmp.ge.s32.totalorder %s12, 4
      %s19 = sphi 0, %s31
      %s20 = sphi 0, %s27
      %s21 = sphi 0, %s19
      %s22 = sphi 0, %s20
      %s23 = sphi 0, %s21
      %s24 = sphi 0, %s22
      %s36 = sphi 0, %s38
      %s39 = sphi 0, %s36
      %s40 = sphi 0, %s39
      %s56 = sphi 0, %s40
      %s60 = sphi 0, %s60
      %s62 = sphi 0, %s60
      %s63 = sphi 0, %s62
      %s77 = sphi 0, %s63
      %s81 = sphi 0, %s81
      %s83 = sphi 0, %s81
      %s84 = sphi 0, %s83
      %s98 = sphi 0, %s84
      %s106 = sphi 0, %s108
      %s109 = sphi 0, %s106
      %s110 = sphi 0, %s109
      %s126 = sphi 0, %s110
    $region4: #{tpu_custom_call.1} parent=1 // loop_header_branch
      %15 = sbr.rel (%p13) target = $region8
    $region5: #{tpu_custom_call.1} parent=1 // loop_body
      %s17 = ssub.s32 %s12, 1
      %s18 = ssub.s32 %s12, 2
      %s25 = sadd.s32 1, %s20
      %p26 = scmp.ge.s32.totalorder %s25, 2
      %s27 = scalar_select %p26, 0, %s25
      %s28 = sadd.s32 1, %s19
      %s29 = scalar_select %p26, %s28, %s19
      %p30 = scmp.ge.s32.totalorder %s29, 1
      %s31 = scalar_select %p30, 0, %s29
      %s32 = ssub.s32 %s19, %s31
      %s33 = ssub.s32 %s20, %s27
      %s34 = sor.u32 %s32, %s33
      %p35 = scmp.eq.s32.totalorder %s34, 0
      %s37 = sadd.s32 %s36, 1
      %s38 = scalar_select %p35, %s36, %s37
      %p41 = pneg %p35
      %p42 = scmp.eq.s32.totalorder %s12, 1
      %p43 = por %p41, %p42
      %p44 = scmp.ne.s32.totalorder %s36, %s39
      %p45 = scmp.eq.s32.totalorder %s12, 0
      %p46 = por %p44, %p45
      %p47 = scmp.ne.s32.totalorder %s36, %s39
      %p48 = scmp.eq.s32.totalorder %s17, 1
      %p49 = por %p47, %p48
      %p50 = scmp.ne.s32.totalorder %s39, %s40
      %p51 = scmp.eq.s32.totalorder %s17, 0
      %p52 = por %p50, %p51
      %p53 = scmp.ne.s32.totalorder %s39, %s40
      %p54 = scmp.eq.s32.totalorder %s18, 1
      %p55 = por %p53, %p54
      %p57 = scmp.ne.s32.totalorder %s40, %s56
      %p58 = scmp.eq.s32.totalorder %s18, 0
      %p59 = por %p57, %p58
      %s61 = sadd.s32 %s60, 1
      %p64 = scmp.eq.s32.totalorder %s12, 1
      %p65 = scmp.ne.s32.totalorder %s60, %s62
      %p66 = scmp.eq.s32.totalorder %s12, 0
      %p67 = por %p65, %p66
      %p68 = scmp.ne.s32.totalorder %s60, %s62
      %p69 = scmp.eq.s32.totalorder %s17, 1
      %p70 = por %p68, %p69
      %p71 = scmp.ne.s32.totalorder %s62, %s63
      %p72 = scmp.eq.s32.totalorder %s17, 0
      %p73 = por %p71, %p72
      %p74 = scmp.ne.s32.totalorder %s62, %s63
      %p75 = scmp.eq.s32.totalorder %s18, 1
      %p76 = por %p74, %p75
      %p78 = scmp.ne.s32.totalorder %s63, %s77
      %p79 = scmp.eq.s32.totalorder %s18, 0
      %p80 = por %p78, %p79
      %s82 = sadd.s32 %s81, 1
      %p85 = scmp.eq.s32.totalorder %s12, 1
      %p86 = scmp.ne.s32.totalorder %s81, %s83
      %p87 = scmp.eq.s32.totalorder %s12, 0
      %p88 = por %p86, %p87
      %p89 = scmp.ne.s32.totalorder %s81, %s83
      %p90 = scmp.eq.s32.totalorder %s17, 1
      %p91 = por %p89, %p90
      %p92 = scmp.ne.s32.totalorder %s83, %s84
      %p93 = scmp.eq.s32.totalorder %s17, 0
      %p94 = por %p92, %p93
      %p95 = scmp.ne.s32.totalorder %s83, %s84
      %p96 = scmp.eq.s32.totalorder %s18, 1
      %p97 = por %p95, %p96
      %p99 = scmp.ne.s32.totalorder %s84, %s98
      %p100 = scmp.eq.s32.totalorder %s18, 0
      %p101 = por %p99, %p100
      %s102 = ssub.s32 %s19, %s31
      %s103 = ssub.s32 %s20, %s27
      %s104 = sor.u32 %s102, %s103
      %p105 = scmp.eq.s32.totalorder %s104, 0
      %s107 = sadd.s32 %s106, 1
      %s108 = scalar_select %p105, %s106, %s107
      %p111 = pneg %p105
      %p112 = scmp.eq.s32.totalorder %s12, 1
      %p113 = por %p111, %p112
      %p114 = scmp.ne.s32.totalorder %s106, %s109
      %p115 = scmp.eq.s32.totalorder %s12, 0
      %p116 = por %p114, %p115
      %p117 = scmp.ne.s32.totalorder %s106, %s109
      %p118 = scmp.eq.s32.totalorder %s17, 1
      %p119 = por %p117, %p118
      %p120 = scmp.ne.s32.totalorder %s109, %s110
      %p121 = scmp.eq.s32.totalorder %s17, 0
      %p122 = por %p120, %p121
      %p123 = scmp.ne.s32.totalorder %s109, %s110
      %p124 = scmp.eq.s32.totalorder %s18, 1
      %p125 = por %p123, %p124
      %p127 = scmp.ne.s32.totalorder %s110, %s126
      %p128 = scmp.eq.s32.totalorder %s18, 0
      %p129 = por %p127, %p128
      %p130 = scmp.le.s32.totalorder 1, %s12
      %p131 = scmp.lt.s32.totalorder %s12, 3
      %p132 = pnand %p130, %p131
      %p133 = pneg %p132
      // Predicated region
      $region9: #{tpu_custom_call.1} parent=5 // pred_check
        _
      $region10: #{tpu_custom_call.1} parent=5 // pred_check_branch
        %135 = sbr.rel (%p132) target = $region12
      $region11: #{tpu_custom_call.1} parent=5 // pred_region
        %s136 = ssub.s32 %s12, 1
        // Predicated region
        $region13: #{tpu_custom_call.1} parent=11 // pred_check
          %p137 = pneg %p73
        $region14: #{tpu_custom_call.1} parent=11 // pred_check_branch
          %139 = sbr.rel (%p137) target = $region16
        $region15: #{tpu_custom_call.1} parent=11 // pred_region
          _
        $region16: #{tpu_custom_call.1} parent=11 // pred_fallthru
          _
        // Predicated region
        $region17: #{tpu_custom_call.1} parent=11 // pred_check
          %p140 = pneg %p94
        $region18: #{tpu_custom_call.1} parent=11 // pred_check_branch
          %142 = sbr.rel (%p140) target = $region20
        $region19: #{tpu_custom_call.1} parent=11 // pred_region
          _
        $region20: #{tpu_custom_call.1} parent=11 // pred_fallthru
          _
      $region12: #{tpu_custom_call.1} parent=5 // pred_fallthru
        _
      %p143 = scmp.lt.s32.totalorder %s12, 2
      // Predicated region
      $region21: #{tpu_custom_call.1} parent=5 // pred_check
        %p144 = pneg %p143
      $region22: #{tpu_custom_call.1} parent=5 // pred_check_branch
        %146 = sbr.rel (%p144) target = $region24
      $region23: #{tpu_custom_call.1} parent=5 // pred_region
        // Predicated region
        $region25: #{tpu_custom_call.1} parent=23 // pred_check
          %p147 = pneg %p46
        $region26: #{tpu_custom_call.1} parent=23 // pred_check_branch
          %149 = sbr.rel (%p147) target = $region28
        $region27: #{tpu_custom_call.1} parent=23 // pred_region
          %p150 = scmp.lt.s32.totalorder %s19, 0
          %s151 = scalar_select %p150, %s19, 0
          %p152 = scmp.lt.s32.totalorder %s20, 1
          %s153 = scalar_select %p152, %s20, 1
          %s154 = smul.addr %s151, 2
          %s155 = sadd.s32 %s153, %s154
          %s156 = smul.addr %s155, 8
          %s157 = scalar_lea.vmem %s0, %s156
        $region28: #{tpu_custom_call.1} parent=23 // pred_fallthru
          _
      $region24: #{tpu_custom_call.1} parent=5 // pred_fallthru
        _
      %p158 = scmp.le.s32.totalorder 1, %s12
      %p159 = scmp.lt.s32.totalorder %s12, 3
      %p160 = pnand %p158, %p159
      %p161 = pneg %p160
      // Predicated region
      $region29: #{tpu_custom_call.1} parent=5 // pred_check
        _
      $region30: #{tpu_custom_call.1} parent=5 // pred_check_branch
        %163 = sbr.rel (%p160) target = $region32
      $region31: #{tpu_custom_call.1} parent=5 // pred_region
        %s164 = ssub.s32 %s12, 1
        %p165 = scmp.lt.s32.totalorder %s21, 0
        %s166 = scalar_select %p165, %s21, 0
        %p167 = scmp.lt.s32.totalorder %s22, 1
        %s168 = scalar_select %p167, %s22, 1
        %s169 = smul.addr %s166, 2
        %s170 = sadd.s32 %s168, %s169
        %s171 = smul.addr %s170, 8
        %s172 = scalar_lea.vmem %s0, %s171
        %p173 = pneg %p52
        %p174 = pneg %p49
        %p175 = pneg %p73
        %p176 = pneg %p70
        %p177 = pneg %p94
        %p178 = pneg %p91
        %p179 = pneg %p122
        %p180 = pneg %p119
        %s181 = sand.u32 %s109, 1
        %s182 = scalar_lea.sflag [#allocation3], %s181
        %s183 = sand.u32 %s109, 1
        %s184 = smul.addr %s183, 8
        %s185 = scalar_lea.vmem [#allocation2], %s184
        %p186 = scmp.lt.s32.totalorder %s21, 0
        %s187 = scalar_select %p186, %s21, 0
        %p188 = scmp.lt.s32.totalorder %s22, 1
        %s189 = scalar_select %p188, %s22, 1
        %s190 = smul.addr %s187, 2
        %s191 = sadd.s32 %s189, %s190
        %s192 = smul.addr %s191, 8
        %s193 = scalar_lea.vmem %s0, %s192
        %s194 = smul.u32 %s21, 8
        %s195 = scalar_lea.vmem %s1, %s194
        %v196 = vld [vmem:[%s195] sm:$0xff]
        %s197 = scalar_lea.vmem %s2, %s194
        %v198 = vld [vmem:[%s197] sm:$0xff]
        %v199 = vld [vmem:[%s193] sm:$0xff]
        %201 = vset.pattern.permute.xlu0 0
        %202 = vperm.xlu0 %201, %v196
        %v203 = vpop.permute.xlu0 %202
        %v205 = vmul.f32 %v199, %v203
        %207 = vset.pattern.permute.xlu0 0
        %208 = vperm.xlu0 %207, %v198
        %v209 = vpop.permute.xlu0 %208
        %v211 = vadd.f32 %v205, %v209
        %212 = vst [vmem:[%s185] sm:$0xff] %v211
        %s213 = sand.u32 %s109, 1
        %s214 = scalar_lea.sflag [#allocation3], %s213
        %s215 = sand.u32 %s109, 1
        %s216 = smul.addr %s215, 8
        %s217 = scalar_lea.vmem [#allocation2], %s216
        // Predicated region
        $region33: #{tpu_custom_call.1} parent=31 // pred_check
          %p218 = pneg %p119
        $region34: #{tpu_custom_call.1} parent=31 // pred_check_branch
          %220 = sbr.rel (%p218) target = $region36
        $region35: #{tpu_custom_call.1} parent=31 // pred_region
          %222 = vsyncadd %s214, 0
          %s223 = smul.addr %s21, 2
          %s224 = sadd.s32 %s22, %s223
          %s225 = smul.addr %s224, 8
          %s226 = scalar_lea.hbm %s3, %s225
          %s228 = sshll.u32 %s217, 4
          %s229 = int_to_ptr.vmem [resolvable:$true] %s228
          %s230 = sshll.u32 %s226, 4
          %s231 = int_to_ptr.hbm [resolvable:$true] %s230
          %233 = dma.vmem_to_hbm [thread:$0]  %s229, 128, %s231, %s214
        $region36: #{tpu_custom_call.1} parent=31 // pred_fallthru
          _
      $region32: #{tpu_custom_call.1} parent=5 // pred_fallthru
        _
      %p234 = scmp.le.s32.totalorder 2, %s12
      // Predicated region
      $region37: #{tpu_custom_call.1} parent=5 // pred_check
        %p235 = pneg %p234
      $region38: #{tpu_custom_call.1} parent=5 // pred_check_branch
        %237 = sbr.rel (%p235) target = $region40
      $region39: #{tpu_custom_call.1} parent=5 // pred_region
        %s238 = ssub.s32 %s12, 2
        // Predicated region
        $region41: #{tpu_custom_call.1} parent=39 // pred_check
          %p239 = pneg %p125
        $region42: #{tpu_custom_call.1} parent=39 // pred_check_branch
          %241 = sbr.rel (%p239) target = $region44
        $region43: #{tpu_custom_call.1} parent=39 // pred_region
          %s242 = sand.u32 %s110, 1
          %s243 = scalar_lea.sflag [#allocation3], %s242
          %s244 = sand.u32 %s110, 1
          %s245 = smul.addr %s244, 8
          %s246 = scalar_lea.vmem [#allocation2], %s245
          %248 = dma.done %s243, 128
        $region44: #{tpu_custom_call.1} parent=39 // pred_fallthru
          _
      $region40: #{tpu_custom_call.1} parent=5 // pred_fallthru
        _
    $region6: #{tpu_custom_call.1} parent=1 // loop_footer
      %s16 = sadd.s32 1, %s12
    $region7: #{tpu_custom_call.1} parent=1 // loop_footer_branch
      %11 = sbr.rel target = $region3
    $region8: #{tpu_custom_call.1} parent=1 // loop_exit
      _
    %249 = vsyncpa [#allocation3], 1
    %s250 = scalar_lea.sflag [#allocation3], 1
    %251 = vsyncpa %s250, 1

</llo_original>
